<compile_context>
chip_gen: v7x
topology: tpu7x:2x2x1
jax: 0.10.0
libtpu: 0.0.40
codegen_flags: <defaults>
</compile_context>

<pallas_src>
import jax
import jax.numpy as jnp
from jax.experimental import pallas as pl
from jax.experimental.pallas import tpu as pltpu


_T_TILE_MAX = 2048                      # preferred lane-tile width (multiple of 128)
_T_TILE_MIN = 512                       # never shrink below this when fitting VMEM
_VMEM_INPUT_BUDGET = 24 * 1024 * 1024   # target for double-buffered input tiles


def _cdiv(a, b):
    return -(-a // b)


def _num_tensorcores_per_chip():
    """2 on v7x-class chips (two TensorCores share the grid's parallel axis),
    1 on v5e / v6e.  Falls back to 1 if the device can't be inspected."""
    try:
        dev = jax.devices()[0]
        if getattr(dev, "platform", "") != "tpu":
            return 1
        kind = str(getattr(dev, "device_kind", "")).lower()
    except Exception:
        return 1
    return 2 if "7" in kind else 1


def _make_index_map(tiles_per_chunk, n_tiles_i):
    last = n_tiles_i - 1

    def index_map(p, t):
        # Clamp so chunks/tiles past this tensor's range stay in bounds; their
        # contribution is zeroed inside the kernel (scalar gate / tail mask).
        return (0, jnp.minimum(p * tiles_per_chunk + t, last))

    return index_map


def _make_loss_kernel(n_inputs, coefs, squares, block_shapes, totals,
                      n_tiles, tiles_per_chunk, grid_tiles):
    """Kernel factory; all arguments are static Python values baked in at trace time."""

    def kernel(*refs):
        x_refs = refs[:n_inputs]
        o_ref = refs[n_inputs]                  # (8, 128) resident accumulator block

        p = pl.program_id(0)                    # parallel chunk (TensorCore on v7x)
        t = pl.program_id(1)                    # tile within chunk (reduction axis)
        u = p * tiles_per_chunk + t             # unclamped global tile index

        @pl.when(t == 0)
        def _init():
            o_ref[...] = jnp.zeros_like(o_ref)

        contrib = jnp.zeros((8, 128), jnp.float32)
        for i in range(n_inputs):
            rows, width = block_shapes[i]
            total = totals[i]
            x = x_refs[i][...].astype(jnp.float32)

            # NOTE: masking must happen BEFORE squaring so out-of-range garbage
            # in the tail block can never produce inf/NaN that survives a 0-gate.
            if width < total and total % width != 0:
                limit = jnp.int32(total) - u * jnp.int32(width)   # <= 0 past range
                col = jax.lax.broadcasted_iota(jnp.int32, (rows, width), 1)
                x = jnp.where(col < limit, x, 0.0)

            if squares[i]:
                x = x * x

            if n_tiles[i] < grid_tiles:
                # Fewer tiles than the grid: zero the clamped re-read tiles with
                # one scalar gate instead of a per-element mask.
                gate = jnp.where(u < n_tiles[i],
                                 jnp.float32(coefs[i]), jnp.float32(0.0))
            else:
                gate = jnp.float32(coefs[i])

            if rows % 8 == 0 and width % 128 == 0:
                # VALU-only accumulation of (8,128)-aligned sub-blocks; the single
                # expensive cross-lane/sublane reduce is deferred to the wrapper.
                part = None
                for r0 in range(0, rows, 8):
                    for c0 in range(0, width, 128):
                        blk = x[r0:r0 + 8, c0:c0 + 128]
                        part = blk if part is None else part + blk
                contrib = contrib + gate * part
            else:
                # Small / ragged tile: full reduce, spread exactly (/2**10 is an
                # exact scaling) over the 8x128 accumulator so the wrapper-side
                # sum recovers it.
                contrib = contrib + (gate * (1.0 / 1024.0)) * jnp.sum(x)

        o_ref[...] = o_ref[...] + contrib

    return kernel


def waveglow_loss(z, log_s_list, log_det_W_list, sigma=1.0):
    """Pallas TPU implementation of WaveGlowLoss.forward((z, log_s_list, log_det_W_list))."""
    sigma2_2 = 2.0 * float(sigma) * float(sigma)

    # TODO(synk): if the model can emit all log_s tensors pre-stacked into one
    # (n_flows, B, C/2, T) buffer, pass it as a single input here (fewer, larger
    # DMA streams).  We deliberately do NOT concatenate in this wrapper: that
    # would cost an extra full HBM read+write of the log_s data.
    tensors = [z] + list(log_s_list)
    coefs = [1.0 / sigma2_2] + [-1.0] * len(log_s_list)
    squares = [True] + [False] * len(log_s_list)

    x2ds, rows_list, time_list = [], [], []
    for x in tensors:
        t_dim = int(x.shape[-1])
        r_dim = int(x.size) // t_dim
        x2ds.append(x.reshape(r_dim, t_dim))    # free row-major collapse -> fills sublanes
        rows_list.append(r_dim)
        time_list.append(t_dim)

    # Pick the lane-tile cap so the double-buffered input footprint fits the
    # VMEM budget (big tiles amortize the ~0.35us per-grid-step overhead).
    def _footprint(cap):
        tot = 0
        for x2d, t_dim in zip(x2ds, time_list):
            w = t_dim if t_dim <= cap else cap
            tot += 2 * x2d.shape[0] * w * x2d.dtype.itemsize
        return tot

    w_cap = _T_TILE_MAX
    while w_cap > _T_TILE_MIN and _footprint(w_cap) > _VMEM_INPUT_BUDGET:
        w_cap //= 2

    tile_ws = [t if t <= w_cap else w_cap for t in time_list]
    n_tiles = [_cdiv(t, w) for t, w in zip(time_list, tile_ws)]
    n_tiles_max = max(n_tiles)

    chunks = max(1, min(_num_tensorcores_per_chip(), n_tiles_max))
    tiles_per_chunk = _cdiv(n_tiles_max, chunks)
    grid_tiles = chunks * tiles_per_chunk

    block_shapes = [(rows_list[i], tile_ws[i]) for i in range(len(tensors))]
    in_specs = [
        pl.BlockSpec(block_shapes[i], _make_index_map(tiles_per_chunk, n_tiles[i]))
        for i in range(len(tensors))
    ]

    kernel = _make_loss_kernel(
        n_inputs=len(tensors), coefs=coefs, squares=squares,
        block_shapes=block_shapes, totals=time_list, n_tiles=n_tiles,
        tiles_per_chunk=tiles_per_chunk, grid_tiles=grid_tiles)

    vmem_limit = int(min(48 * 1024 * 1024,
                         max(32 * 1024 * 1024,
                             _footprint(w_cap) + 8 * 1024 * 1024)))

    partials = pl.pallas_call(
        kernel,
        out_shape=jax.ShapeDtypeStruct((chunks * 8, 128), jnp.float32),
        grid_spec=pltpu.PrefetchScalarGridSpec(
            num_scalar_prefetch=0,
            grid=(chunks, tiles_per_chunk),
            in_specs=in_specs,
            out_specs=pl.BlockSpec((8, 128), lambda p, t: (p, 0)),
        ),
        compiler_params=pltpu.CompilerParams(
            dimension_semantics=("parallel", "arbitrary"),
            vmem_limit_bytes=vmem_limit),
    )(*x2ds)

    # Single cross-lane/sublane reduce, once, outside the hot loop.
    data_terms = jnp.sum(partials)

    # TODO(synk): per-flow log_det_W values are scalars; summing them (and the
    # final normalization) is O(1) scalar work with no useful Pallas equivalent.
    log_det_W_total = jnp.float32(0.0)
    for log_det_W in log_det_W_list:
        log_det_W_total = log_det_W_total + jnp.asarray(log_det_W, jnp.float32)

    loss = data_terms - log_det_W_total
    denom = z.shape[0] * z.shape[1] * z.shape[2]
    return loss / denom


if __name__ == "__main__":
    key = jax.random.PRNGKey(0)
    k_z, k_s0, k_s1 = jax.random.split(key, 3)

    # Small shapes consistent with WaveGlow: z (batch, n_group, n_of_groups),
    # each log_s (batch, n_group//2, n_of_groups), one log_det_W scalar per flow.
    # T=256 keeps the run tiny while exercising the lane-aligned vector
    # accumulation path (z) and the small/ragged fallback path (log_s).
    B, C, T = 2, 4, 256
    sigma = 1.0

    z = jax.random.normal(k_z, (B, C, T), dtype=jnp.float32)
    log_s_list = [
        0.1 * jax.random.normal(k_s0, (B, C // 2, T), dtype=jnp.float32),
        0.1 * jax.random.normal(k_s1, (B, C // 2, T), dtype=jnp.float32),
    ]
    log_det_W_list = [jnp.float32(0.05), jnp.float32(-0.02)]

    loss = waveglow_loss(z, log_s_list, log_det_W_list, sigma=sigma)
    loss = jax.block_until_ready(loss)

    # Plain-JAX reference matching the PyTorch forward.
    log_s_total = sum(jnp.sum(ls) for ls in log_s_list)
    log_det_W_total = sum(log_det_W_list)
    ref = (jnp.sum(z * z) / (2 * sigma * sigma)
           - log_s_total - log_det_W_total) / (B * C * T)

    assert jnp.allclose(loss, ref, atol=1e-5, rtol=1e-5), (loss, ref)
    print("KERNEL_OK")
</pallas_src>

<mosaic_0001>
module attributes {stable_mosaic.version = 11 : i64} {
  func.func @kernel(%arg0: i32, %arg1: i32, %arg2: memref<8x256xf32, #tpu.memory_space<vmem>>, %arg3: memref<4x256xf32, #tpu.memory_space<vmem>>, %arg4: memref<4x256xf32, #tpu.memory_space<vmem>>, %arg5: memref<8x128xf32, #tpu.memory_space<vmem>>) attributes {dimension_semantics = [#tpu.dimension_semantics<parallel>, #tpu.dimension_semantics<arbitrary>], iteration_bounds = array<i64: 1, 1>, scalar_prefetch = 0 : i64, scratch_operands = 0 : i64, tpu.core_type = #tpu.core_type<tc>, window_params = [{transform_indices = @transform_0, window_bounds = array<i64: 8, 256>}, {transform_indices = @transform_1, window_bounds = array<i64: 4, 256>}, {transform_indices = @transform_2, window_bounds = array<i64: 4, 256>}, {transform_indices = @transform_3, window_bounds = array<i64: 8, 128>}]} {
    %c0_i32 = arith.constant 0 : i32
    %0 = arith.cmpi eq, %arg1, %c0_i32 : i32
    %1 = arith.extui %0 : i1 to i32
    %c0_i32_0 = arith.constant 0 : i32
    %2 = arith.cmpi ne, %1, %c0_i32_0 : i32
    scf.if %2 {
      %cst_17 = arith.constant 0.000000e+00 : f32
      %33 = vector.broadcast %cst_17 : f32 to vector<8x128xf32>
      %c0_18 = arith.constant 0 : index
      %c0_19 = arith.constant 0 : index
      %34 = vector.load %arg5[%c0_18, %c0_19] : memref<8x128xf32, #tpu.memory_space<vmem>>, vector<8x128xf32>
      tpu.vector_store %arg5[%c0_18, %c0_19], %33 {strides = array<i32>} : memref<8x128xf32, #tpu.memory_space<vmem>>, vector<8x128xf32>,
    } else {
    }
    %cst = arith.constant 0.000000e+00 : f32
    %3 = vector.broadcast %cst : f32 to vector<8x128xf32>
    %c0 = arith.constant 0 : index
    %c0_1 = arith.constant 0 : index
    %4 = vector.load %arg2[%c0, %c0_1] : memref<8x256xf32, #tpu.memory_space<vmem>>, vector<8x256xf32>
    %5 = arith.mulf %4, %4 : vector<8x256xf32>
    %6 = vector.extract_strided_slice %5 {offsets = [0, 0], sizes = [8, 128], strides = [1, 1]} : vector<8x256xf32> to vector<8x128xf32>
    %7 = vector.extract_strided_slice %5 {offsets = [0, 128], sizes = [8, 128], strides = [1, 1]} : vector<8x256xf32> to vector<8x128xf32>
    %8 = arith.addf %6, %7 : vector<8x128xf32>
    %cst_2 = arith.constant 5.000000e-01 : f32
    %9 = vector.broadcast %cst_2 : f32 to vector<8x128xf32>
    %10 = arith.mulf %9, %8 : vector<8x128xf32>
    %11 = arith.addf %3, %10 : vector<8x128xf32>
    %c0_3 = arith.constant 0 : index
    %c0_4 = arith.constant 0 : index
    %12 = vector.load %arg3[%c0_3, %c0_4] : memref<4x256xf32, #tpu.memory_space<vmem>>, vector<4x256xf32>
    %cst_5 = arith.constant -1.000000e+00 : f32
    %cst_6 = arith.constant 9.765625E-4 : f32
    %13 = arith.mulf %cst_5, %cst_6 : f32
    %14 = vector.shape_cast %12 : vector<4x256xf32> to vector<1x4x256xf32>
    %cst_7 = arith.constant dense<0.000000e+00> : vector<1xf32>
    %15 = vector.multi_reduction <add>, %14, %cst_7 [1, 2] : vector<1x4x256xf32> to vector<1xf32>
    %16 = vector.shape_cast %15 : vector<1xf32> to vector<1x1x1xf32>
    %17 = vector.extract %16[0, 0, 0] : f32 from vector<1x1x1xf32>
    %18 = arith.mulf %13, %17 : f32
    %19 = vector.broadcast %18 : f32 to vector<8x128xf32>
    %20 = arith.addf %11, %19 : vector<8x128xf32>
    %c0_8 = arith.constant 0 : index
    %c0_9 = arith.constant 0 : index
    %21 = vector.load %arg4[%c0_8, %c0_9] : memref<4x256xf32, #tpu.memory_space<vmem>>, vector<4x256xf32>
    %cst_10 = arith.constant -1.000000e+00 : f32
    %cst_11 = arith.constant 9.765625E-4 : f32
    %22 = arith.mulf %cst_10, %cst_11 : f32
    %23 = vector.shape_cast %21 : vector<4x256xf32> to vector<1x4x256xf32>
    %cst_12 = arith.constant dense<0.000000e+00> : vector<1xf32>
    %24 = vector.multi_reduction <add>, %23, %cst_12 [1, 2] : vector<1x4x256xf32> to vector<1xf32>
    %25 = vector.shape_cast %24 : vector<1xf32> to vector<1x1x1xf32>
    %26 = vector.extract %25[0, 0, 0] : f32 from vector<1x1x1xf32>
    %27 = arith.mulf %22, %26 : f32
    %28 = vector.broadcast %27 : f32 to vector<8x128xf32>
    %29 = arith.addf %20, %28 : vector<8x128xf32>
    %c0_13 = arith.constant 0 : index
    %c0_14 = arith.constant 0 : index
    %30 = vector.load %arg5[%c0_13, %c0_14] : memref<8x128xf32, #tpu.memory_space<vmem>>, vector<8x128xf32>
    %31 = arith.addf %30, %29 : vector<8x128xf32>
    %c0_15 = arith.constant 0 : index
    %c0_16 = arith.constant 0 : index
    %32 = vector.load %arg5[%c0_15, %c0_16] : memref<8x128xf32, #tpu.memory_space<vmem>>, vector<8x128xf32>
    tpu.vector_store %arg5[%c0_15, %c0_16], %31 {strides = array<i32>} : memref<8x128xf32, #tpu.memory_space<vmem>>, vector<8x128xf32>,
    return
  }
  func.func @transform_0(%arg0: i32, %arg1: i32) -> (i32, i32) {
    %c1_i32 = arith.constant 1 : i32
    %0 = arith.muli %arg0, %c1_i32 : i32
    %1 = arith.addi %0, %arg1 : i32
    %c0_i32 = arith.constant 0 : i32
    %2 = arith.minsi %1, %c0_i32 : i32
    %c0_i32_0 = arith.constant 0 : i32
    %c0_i32_1 = arith.constant 0 : i32
    return %c0_i32_0, %2 : i32, i32
  }
  func.func @transform_1(%arg0: i32, %arg1: i32) -> (i32, i32) {
    %c1_i32 = arith.constant 1 : i32
    %0 = arith.muli %arg0, %c1_i32 : i32
    %1 = arith.addi %0, %arg1 : i32
    %c0_i32 = arith.constant 0 : i32
    %2 = arith.minsi %1, %c0_i32 : i32
    %c0_i32_0 = arith.constant 0 : i32
    %c0_i32_1 = arith.constant 0 : i32
    return %c0_i32_0, %2 : i32, i32
  }
  func.func @transform_2(%arg0: i32, %arg1: i32) -> (i32, i32) {
    %c1_i32 = arith.constant 1 : i32
    %0 = arith.muli %arg0, %c1_i32 : i32
    %1 = arith.addi %0, %arg1 : i32
    %c0_i32 = arith.constant 0 : i32
    %2 = arith.minsi %1, %c0_i32 : i32
    %c0_i32_0 = arith.constant 0 : i32
    %c0_i32_1 = arith.constant 0 : i32
    return %c0_i32_0, %2 : i32, i32
  }
  func.func @transform_3(%arg0: i32, %arg1: i32) -> (i32, i32) {
    %c0_i32 = arith.constant 0 : i32
    %c0_i32_0 = arith.constant 0 : i32
    return %arg0, %c0_i32 : i32, i32
  }
}

</mosaic_0001>

<llo_original>
// kernel: tpu_custom_call.1
$region0: #{tpu_custom_call.1}
  #allocation0 [shape = 'u32[]', space=smem, size = 0x4, offset = 0x4, fixed_abs, tag = 'smem constant byte address 0x4 - core index']
  #allocation1 [shape = 'u32[144,128]{1,0:T(1,128)}', space=vmem, size = 0x12000, scoped, tag = 'internal scratch']
  %s0 = inlined_call_operand.hbm [shape: f32[8,256], index: 0, kind: input, shape index: {}]
  %s1 = inlined_call_operand.hbm [shape: f32[4,256], index: 1, kind: input, shape index: {}]
  %s2 = inlined_call_operand.hbm [shape: f32[4,256], index: 2, kind: input, shape index: {}]
  %s3 = inlined_call_operand.hbm [shape: f32[8,128], index: 3, kind: output, shape index: {}]
  %s4 = sld [smem:[#allocation0]]
  $region38: #{tpu_custom_call.1} parent=0
    _
  %s6 = ssub.s32 1, %s4
  %s7 = scalar_select 0, %s6, %s4
  $region1: #{tpu_custom_call.1} parent=0
    #allocation2 [shape = 'u8[8192]{0}', space=vmem, size = 0x2000, scoped, tag = 'input window, operand 0, single buffered']
    #allocation3 [shape = 's32[1]{0}', space=sflag, size = 0x4, scoped, tag = 'scoped memory for tpu_custom_call.1']
    #allocation4 [shape = 's32[1]{0}', space=sflag, size = 0x4, scoped, tag = 'scoped memory for tpu_custom_call.1']
    #allocation5 [shape = 'u8[4096]{0}', space=vmem, size = 0x1000, scoped, tag = 'input window, operand 1, single buffered']
    #allocation6 [shape = 's32[1]{0}', space=sflag, size = 0x4, scoped, tag = 'scoped memory for tpu_custom_call.1']
    #allocation7 [shape = 'u8[4096]{0}', space=vmem, size = 0x1000, scoped, tag = 'input window, operand 2, single buffered']
    #allocation8 [shape = 'u8[4096]{0}', space=vmem, size = 0x1000, scoped, tag = 'output window, operand 0, single buffered']
    %8 = vsyncpa [#allocation3], 0
    %9 = vsyncpa [#allocation6], 0
    %10 = vsyncpa [#allocation4], 0
    // Predicated region
    $region2: #{tpu_custom_call.1} parent=1 // pred_check
      _
    $region3: #{tpu_custom_call.1} parent=1 // pred_check_branch
      %12 = sbr.rel (0) target = $region5
    $region4: #{tpu_custom_call.1} parent=1 // pred_region
      %s13 = sadd.s32 0, 0
      %p14 = scmp.lt.s32.totalorder %s13, 0
      %s15 = scalar_select %p14, %s13, 0
      %s16 = smul.u32 2, %s15
      %s18 = ssub.s32 256, 256
      %19 = vsyncadd [#allocation3], %s18
      %s20 = smul.addr %s16, 128
      %s21 = scalar_lea.hbm %s0, %s20
      %s23 = sshll.u32 [#allocation2], 4
      %s24 = int_to_ptr.vmem [resolvable:$true] %s23
      %26 = dma.hbm_to_vmem [thread:$0]  %s21, 256, %s24, [#allocation3]
    $region5: #{tpu_custom_call.1} parent=1 // pred_fallthru
      _
    // Predicated region
    $region6: #{tpu_custom_call.1} parent=1 // pred_check
      _
    $region7: #{tpu_custom_call.1} parent=1 // pred_check_branch
      %28 = sbr.rel (0) target = $region9
    $region8: #{tpu_custom_call.1} parent=1 // pred_region
      %s29 = sadd.s32 0, 0
      %p30 = scmp.lt.s32.totalorder %s29, 0
      %s31 = scalar_select %p30, %s29, 0
      %s32 = smul.u32 2, %s31
      %s34 = ssub.s32 128, 128
      %35 = vsyncadd [#allocation6], %s34
      %s36 = smul.addr %s32, 64
      %s37 = scalar_lea.hbm %s1, %s36
      %s39 = sshll.u32 [#allocation5], 4
      %s40 = int_to_ptr.vmem [resolvable:$true] %s39
      %42 = dma.hbm_to_vmem [thread:$0]  %s37, 128, %s40, [#allocation6]
    $region9: #{tpu_custom_call.1} parent=1 // pred_fallthru
      _
    // Predicated region
    $region10: #{tpu_custom_call.1} parent=1 // pred_check
      _
    $region11: #{tpu_custom_call.1} parent=1 // pred_check_branch
      %44 = sbr.rel (0) target = $region13
    $region12: #{tpu_custom_call.1} parent=1 // pred_region
      %s45 = sadd.s32 0, 0
      %p46 = scmp.lt.s32.totalorder %s45, 0
      %s47 = scalar_select %p46, %s45, 0
      %s48 = smul.u32 2, %s47
      %s50 = ssub.s32 128, 128
      %51 = vsyncadd [#allocation6], %s50
      %s52 = smul.addr %s48, 64
      %s53 = scalar_lea.hbm %s2, %s52
      %s55 = sshll.u32 [#allocation7], 4
      %s56 = int_to_ptr.vmem [resolvable:$true] %s55
      %58 = dma.hbm_to_vmem [thread:$0]  %s53, 128, %s56, [#allocation6]
    $region13: #{tpu_custom_call.1} parent=1 // pred_fallthru
      _
    // Predicated region
    $region14: #{tpu_custom_call.1} parent=1 // pred_check
      _
    $region15: #{tpu_custom_call.1} parent=1 // pred_check_branch
      %60 = sbr.rel (0) target = $region17
    $region16: #{tpu_custom_call.1} parent=1 // pred_region
      %61 = dma.done [#allocation3], 256
    $region17: #{tpu_custom_call.1} parent=1 // pred_fallthru
      _
    // Predicated region
    $region18: #{tpu_custom_call.1} parent=1 // pred_check
      _
    $region19: #{tpu_custom_call.1} parent=1 // pred_check_branch
      %63 = sbr.rel (0) target = $region21
    $region20: #{tpu_custom_call.1} parent=1 // pred_region
      %64 = dma.done [#allocation6], 128
    $region21: #{tpu_custom_call.1} parent=1 // pred_fallthru
      _
    // Predicated region
    $region22: #{tpu_custom_call.1} parent=1 // pred_check
      _
    $region23: #{tpu_custom_call.1} parent=1 // pred_check_branch
      %66 = sbr.rel (0) target = $region25
    $region24: #{tpu_custom_call.1} parent=1 // pred_region
      %67 = dma.done [#allocation6], 128
    $region25: #{tpu_custom_call.1} parent=1 // pred_fallthru
      _
    %s68 = sadd.s32 0, 0
    %p69 = scmp.lt.s32.totalorder %s68, 0
    %s70 = scalar_select %p69, %s68, 0
    %s71 = smul.u32 2, %s70
    %s72 = sadd.s32 0, 0
    %p73 = scmp.lt.s32.totalorder %s72, 0
    %s74 = scalar_select %p73, %s72, 0
    %s75 = smul.u32 2, %s74
    %s76 = sadd.s32 0, 0
    %p77 = scmp.lt.s32.totalorder %s76, 0
    %s78 = scalar_select %p77, %s76, 0
    %s79 = smul.u32 2, %s78
    %p80 = scmp.eq.s32.totalorder 0, 0
    // Predicated region
    $region26: #{tpu_custom_call.1} parent=1 // pred_check
      %p81 = pneg %p80
    $region27: #{tpu_custom_call.1} parent=1 // pred_check_branch
      %83 = sbr.rel (%p81) target = $region29
    $region28: #{tpu_custom_call.1} parent=1 // pred_region
      %84 = vst [vmem:[#allocation8] sm:$0xff] 0.0
    $region29: #{tpu_custom_call.1} parent=1 // pred_fallthru
      _
    %v85 = vld [vmem:[#allocation2] sm:$0xff]
    %v86 = vld [vmem:[#allocation2 + $0x8] sm:$0xff]
    %v87 = vmul.f32 %v85, %v85
    %v88 = vmul.f32 %v86, %v86
    %v89 = vadd.f32 %v87, %v88
    %v90 = vmul.f32 %v89, 0.5
    %v91 = vadd.f32 %v90, 0.0
    %v92 = vld [vmem:[#allocation5] sm:$0xff]
    %v94 = vcombine.high %v92, %v92
    %vm96 = vcmask 1043456
    %v97 = vsel %vm96, %v92, 0.0
    %v98 = vsel %vm96, %v94, 0.0
    %v99 = vadd.f32 %v97, %v98
    %100 = vadd.xlane.f32.xlu0 %v99
    %v101 = vpop.xlane.xlu0 %100
    %v102 = vrot.slane %v101, 4
    %v103 = vadd.f32 %v101, %v102
    %v104 = vrot.slane %v103, 2
    %v105 = vadd.f32 %v103, %v104
    %v106 = vrot.slane %v105, 1
    %v107 = vadd.f32 %v105, %v106
    %s108 = vtos %v107
    %s109 = smul.f32 %s108, -0.0009765625
    %v110 = vstv %s109
    %v111 = vadd.f32 %v91, %v110
    %v112 = vld [vmem:[#allocation7] sm:$0xff]
    %v114 = vcombine.high %v112, %v112
    %v116 = vsel %vm96, %v112, 0.0
    %v117 = vsel %vm96, %v114, 0.0
    %v118 = vadd.f32 %v116, %v117
    %119 = vadd.xlane.f32.xlu0 %v118
    %v120 = vpop.xlane.xlu0 %119
    %v121 = vrot.slane %v120, 4
    %v122 = vadd.f32 %v120, %v121
    %v123 = vrot.slane %v122, 2
    %v124 = vadd.f32 %v122, %v123
    %v125 = vrot.slane %v124, 1
    %v126 = vadd.f32 %v124, %v125
    %s127 = vtos %v126
    %s128 = smul.f32 %s127, -0.0009765625
    %v129 = vstv %s128
    %v130 = vadd.f32 %v111, %v129
    %v131 = vld [vmem:[#allocation8] sm:$0xff]
    %v132 = vadd.f32 %v131, %v130
    %133 = vst [vmem:[#allocation8] sm:$0xff] %v132
    // Predicated region
    $region30: #{tpu_custom_call.1} parent=1 // pred_check
      _
    $region31: #{tpu_custom_call.1} parent=1 // pred_check_branch
      %135 = sbr.rel (0) target = $region33
    $region32: #{tpu_custom_call.1} parent=1 // pred_region
      %s137 = ssub.s32 128, 128
      %138 = vsyncadd [#allocation4], %s137
      %s140 = sshll.u32 [#allocation8], 4
      %s141 = int_to_ptr.vmem [resolvable:$true] %s140
      %143 = dma.vmem_to_hbm [thread:$0]  %s141, 128, %s3, [#allocation4]
    $region33: #{tpu_custom_call.1} parent=1 // pred_fallthru
      _
    // Predicated region
    $region34: #{tpu_custom_call.1} parent=1 // pred_check
      _
    $region35: #{tpu_custom_call.1} parent=1 // pred_check_branch
      %145 = sbr.rel (0) target = $region37
    $region36: #{tpu_custom_call.1} parent=1 // pred_region
      %146 = dma.done [#allocation4], 128
    $region37: #{tpu_custom_call.1} parent=1 // pred_fallthru
      _
    %147 = vsyncpa [#allocation3], 1
    %148 = vsyncpa [#allocation6], 1
    %149 = vsyncpa [#allocation4], 1

</llo_original>
